<compile_context>
chip_gen: v6e
topology: v6e:2x2x1
jax: 0.10.0
libtpu: 0.0.40
codegen_flags: <defaults>
</compile_context>

<pallas_src>
import functools
import math

import jax
import jax.numpy as jnp
from jax.experimental import pallas as pl
from jax.experimental.pallas import tpu as pltpu


def _round_up(x, m):
    return ((x + m - 1) // m) * m


# ----------------------------- fused Pallas kernel -----------------------------

def _hypernet_kernel(x_ref, w1_ref, b1_ref, w2_ref, b2_ref, o_ref, *, activation):
    """One row-tile of:  y = act(x @ w1 + b1) @ w2 + b2  (h kept on-chip).

    x/w1/w2 arrive already in the compute dtype (cast in the wrapper); both
    matmuls accumulate in f32; bias-add and activation run in f32.
    """
    h = jnp.dot(x_ref[...], w1_ref[...], preferred_element_type=jnp.float32)
    h = h + b1_ref[...]

    if activation == 'relu':
        h = jnp.maximum(h, 0.0)
    elif activation == 'tanh':
        h = jnp.tanh(h)
    elif activation == 'leaky_relu':
        h = jnp.where(h >= 0.0, h, 0.01 * h)
    elif activation == 'elu':
        h = jnp.where(h >= 0.0, h, jnp.expm1(h))
    else:
        # TODO(synk): 'prelu' needs a learned per-channel slope parameter; not implemented here.
        raise ValueError(f"unsupported activation: {activation}")

    y = jnp.dot(h.astype(w2_ref.dtype), w2_ref[...],
                preferred_element_type=jnp.float32)
    y = y + b2_ref[...]
    o_ref[...] = y.astype(o_ref.dtype)


def hypernet_forward(x, params, *, main_input_dim, main_output_dim, n_heads,
                     activation='relu', compute_dtype=jnp.bfloat16,
                     out_dtype=jnp.float32, row_block=512):
    """Pallas implementation of Hypernet.forward(x).

    x:       [N, input_dim]
    returns: [-1, main_input_dim, main_output_dim * n_heads] (same as the PyTorch .view).
    """
    w1, b1, w2, b2 = params['w1'], params['b1'], params['w2'], params['b2']
    N, Din = x.shape
    Dh = w1.shape[1]
    Dout = w2.shape[1]
    assert Dout == main_input_dim * main_output_dim * n_heads

    # Cast the large input streams in the wrapper (halves DMA bytes for bf16);
    # biases stay f32 (bias-add happens on the f32 accumulator).
    x_c = x.astype(compute_dtype)
    w1_c = w1.astype(compute_dtype)
    w2_c = w2.astype(compute_dtype)
    b1_f = b1.astype(jnp.float32).reshape(1, Dh)
    b2_f = b2.astype(jnp.float32).reshape(1, Dout)

    # --- row tiling: no padding; partial last block handled by the pipeline ---
    row_block = max(8, _round_up(row_block, 8))
    if N <= row_block:
        TM = N                      # full-array block: always a legal block shape
    else:
        TM = row_block              # multiple of 8; partial last block is fine
    n_blocks = pl.cdiv(N, TM)
    # v7x megacore: give the second TensorCore work when a single block is large.
    if n_blocks == 1 and N > 256:
        TM = _round_up(pl.cdiv(N, 2), 8)
        n_blocks = pl.cdiv(N, TM)
    grid = (n_blocks,)

    in_bytes = jnp.dtype(compute_dtype).itemsize
    out_bytes = jnp.dtype(out_dtype).itemsize
    flops = 2 * N * (Din * Dh + Dh * Dout)
    transcendentals = N * Dh if activation in ('tanh', 'elu') else 0
    bytes_accessed = (in_bytes * (N * Din + Din * Dh + Dh * Dout)
                      + 4 * (Dh + Dout)
                      + out_bytes * N * Dout)
    cost = pl.CostEstimate(flops=flops, transcendentals=transcendentals,
                           bytes_accessed=bytes_accessed)

    kern = functools.partial(_hypernet_kernel, activation=activation)

    y = pl.pallas_call(
        kern,
        out_shape=jax.ShapeDtypeStruct((N, Dout), out_dtype),
        grid=grid,
        in_specs=[
            pl.BlockSpec((TM, Din), lambda i: (i, 0)),    # x row tile
            pl.BlockSpec((Din, Dh), lambda i: (0, 0)),    # w1 (resident across grid)
            pl.BlockSpec((1, Dh), lambda i: (0, 0)),      # b1
            pl.BlockSpec((Dh, Dout), lambda i: (0, 0)),   # w2 (resident across grid)
            pl.BlockSpec((1, Dout), lambda i: (0, 0)),    # b2
        ],
        out_specs=pl.BlockSpec((TM, Dout), lambda i: (i, 0)),
        compiler_params=pltpu.CompilerParams(
            dimension_semantics=("parallel",),
        ),
        cost_estimate=cost,
    )(x_c, w1_c, b1_f, w2_c, b2_f)

    # Matches the PyTorch `.view([-1, main_input_dim, main_output_dim * n_heads])`.
    return y.reshape(-1, main_input_dim, main_output_dim * n_heads)


# ----------------------------- pure-JAX reference -----------------------------

def hypernet_reference(x, params, *, main_input_dim, main_output_dim, n_heads,
                       activation='relu', compute_dtype=jnp.bfloat16,
                       out_dtype=jnp.float32):
    w1, b1, w2, b2 = params['w1'], params['b1'], params['w2'], params['b2']
    h = jnp.dot(x.astype(compute_dtype), w1.astype(compute_dtype),
                preferred_element_type=jnp.float32) + b1
    if activation == 'relu':
        h = jnp.maximum(h, 0.0)
    elif activation == 'tanh':
        h = jnp.tanh(h)
    elif activation == 'leaky_relu':
        h = jnp.where(h >= 0.0, h, 0.01 * h)
    elif activation == 'elu':
        h = jnp.where(h >= 0.0, h, jnp.expm1(h))
    else:
        raise ValueError(activation)
    y = jnp.dot(h.astype(compute_dtype), w2.astype(compute_dtype),
                preferred_element_type=jnp.float32) + b2
    y = y.astype(out_dtype)
    return y.reshape(-1, main_input_dim, main_output_dim * n_heads)


# ----------------------------- parameter init (torch.nn.Linear default) ---------

def init_hypernet_params(key, input_dim, hidden_dim, main_input_dim, main_output_dim, n_heads):
    out_dim = main_input_dim * main_output_dim * n_heads
    k1, k2, k3, k4 = jax.random.split(key, 4)
    lim1 = 1.0 / math.sqrt(input_dim)
    lim2 = 1.0 / math.sqrt(hidden_dim)
    return {
        'w1': jax.random.uniform(k1, (input_dim, hidden_dim), jnp.float32, -lim1, lim1),
        'b1': jax.random.uniform(k2, (hidden_dim,), jnp.float32, -lim1, lim1),
        'w2': jax.random.uniform(k3, (hidden_dim, out_dim), jnp.float32, -lim2, lim2),
        'b2': jax.random.uniform(k4, (out_dim,), jnp.float32, -lim2, lim2),
    }


# ----------------------------- main -----------------------------

if __name__ == "__main__":
    key = jax.random.PRNGKey(0)
    kp1, kp2, kx1, kx2 = jax.random.split(key, 4)

    # Config 1: "enemy" hypernet shapes (SMAC-like): bs=2, n_agents=3, n_enemies=4
    #   rows N = 2*3*4 = 24, input_dim = enemy_feats_dim = 5,
    #   hidden_dim = hpn_hyper_dim = 64, main_output_dim = rnn_hidden_dim = 32, n_heads = 2.
    cfg1 = dict(input_dim=5, hidden_dim=64, main_input_dim=5, main_output_dim=32,
                n_heads=2, activation='relu')
    params1 = init_hypernet_params(kp1, cfg1['input_dim'], cfg1['hidden_dim'],
                                   cfg1['main_input_dim'], cfg1['main_output_dim'],
                                   cfg1['n_heads'])
    x1 = jax.random.normal(kx1, (24, cfg1['input_dim']), jnp.float32)

    out1 = hypernet_forward(
        x1, params1, main_input_dim=cfg1['main_input_dim'],
        main_output_dim=cfg1['main_output_dim'], n_heads=cfg1['n_heads'],
        activation=cfg1['activation'], compute_dtype=jnp.bfloat16)
    out1 = jax.block_until_ready(out1)
    ref1 = hypernet_reference(
        x1, params1, main_input_dim=cfg1['main_input_dim'],
        main_output_dim=cfg1['main_output_dim'], n_heads=cfg1['n_heads'],
        activation=cfg1['activation'], compute_dtype=jnp.bfloat16)
    assert out1.shape == ref1.shape == (24, 5, 64), (out1.shape, ref1.shape)
    assert jnp.allclose(out1, ref1, atol=2e-3, rtol=2e-3), float(jnp.max(jnp.abs(out1 - ref1)))

    # Config 2: "ally" hypernet shapes with non-multiple-of-8 row count (partial-block
    # path, no padding) and the tanh activation + fp32 compute path.
    cfg2 = dict(input_dim=6, hidden_dim=16, main_input_dim=6, main_output_dim=33,
                n_heads=2, activation='tanh')
    params2 = init_hypernet_params(kp2, cfg2['input_dim'], cfg2['hidden_dim'],
                                   cfg2['main_input_dim'], cfg2['main_output_dim'],
                                   cfg2['n_heads'])
    x2 = jax.random.normal(kx2, (12, cfg2['input_dim']), jnp.float32)

    out2 = hypernet_forward(
        x2, params2, main_input_dim=cfg2['main_input_dim'],
        main_output_dim=cfg2['main_output_dim'], n_heads=cfg2['n_heads'],
        activation=cfg2['activation'], compute_dtype=jnp.float32)
    out2 = jax.block_until_ready(out2)
    ref2 = hypernet_reference(
        x2, params2, main_input_dim=cfg2['main_input_dim'],
        main_output_dim=cfg2['main_output_dim'], n_heads=cfg2['n_heads'],
        activation=cfg2['activation'], compute_dtype=jnp.float32)
    assert out2.shape == ref2.shape == (12, 6, 66), (out2.shape, ref2.shape)
    assert jnp.allclose(out2, ref2, atol=2e-3, rtol=2e-3), float(jnp.max(jnp.abs(out2 - ref2)))

    # Config 3: larger row count exercising the multi-block "parallel" grid with a
    # partial last block (no row padding) and bf16 output writeback.
    x3 = jax.random.normal(kx1, (1000, cfg1['input_dim']), jnp.float32)
    out3 = hypernet_forward(
        x3, params1, main_input_dim=cfg1['main_input_dim'],
        main_output_dim=cfg1['main_output_dim'], n_heads=cfg1['n_heads'],
        activation=cfg1['activation'], compute_dtype=jnp.bfloat16,
        out_dtype=jnp.bfloat16, row_block=512)
    out3 = jax.block_until_ready(out3)
    ref3 = hypernet_reference(
        x3, params1, main_input_dim=cfg1['main_input_dim'],
        main_output_dim=cfg1['main_output_dim'], n_heads=cfg1['n_heads'],
        activation=cfg1['activation'], compute_dtype=jnp.bfloat16,
        out_dtype=jnp.bfloat16)
    assert out3.shape == ref3.shape == (1000, 5, 64), (out3.shape, ref3.shape)
    assert jnp.allclose(out3.astype(jnp.float32), ref3.astype(jnp.float32),
                        atol=2e-2, rtol=2e-2), \
        float(jnp.max(jnp.abs(out3.astype(jnp.float32) - ref3.astype(jnp.float32))))

    print("KERNEL_OK")
</pallas_src>

<mosaic_0001>
module attributes {stable_mosaic.version = 11 : i64} {
  func.func @_hypernet_kernel(%arg0: i32, %arg1: memref<24x5xbf16, #tpu.memory_space<vmem>>, %arg2: memref<5x64xbf16, #tpu.memory_space<vmem>>, %arg3: memref<1x64xf32, #tpu.memory_space<vmem>>, %arg4: memref<64x320xbf16, #tpu.memory_space<vmem>>, %arg5: memref<1x320xf32, #tpu.memory_space<vmem>>, %arg6: memref<24x320xf32, #tpu.memory_space<vmem>>) attributes {dimension_semantics = [#tpu.dimension_semantics<parallel>], iteration_bounds = array<i64: 1>, scalar_prefetch = 0 : i64, scratch_operands = 0 : i64, tpu.core_type = #tpu.core_type<tc>, window_params = [{transform_indices = @transform_0, window_bounds = array<i64: 24, 5>}, {pipeline_mode = #tpu.pipeline_mode<synchronous>, transform_indices = @transform_1, window_bounds = array<i64: 5, 64>}, {pipeline_mode = #tpu.pipeline_mode<synchronous>, transform_indices = @transform_2, window_bounds = array<i64: 1, 64>}, {pipeline_mode = #tpu.pipeline_mode<synchronous>, transform_indices = @transform_3, window_bounds = array<i64: 64, 320>}, {pipeline_mode = #tpu.pipeline_mode<synchronous>, transform_indices = @transform_4, window_bounds = array<i64: 1, 320>}, {transform_indices = @transform_5, window_bounds = array<i64: 24, 320>}]} {
    %c0 = arith.constant 0 : index
    %c0_0 = arith.constant 0 : index
    %0 = vector.load %arg1[%c0, %c0_0] : memref<24x5xbf16, #tpu.memory_space<vmem>>, vector<24x5xbf16>
    %c0_1 = arith.constant 0 : index
    %c0_2 = arith.constant 0 : index
    %1 = vector.load %arg2[%c0_1, %c0_2] : memref<5x64xbf16, #tpu.memory_space<vmem>>, vector<5x64xbf16>
    %cst = arith.constant dense<0.000000e+00> : vector<24x64xf32>
    %2 = tpu.matmul %0, %1, %cst {dimension_numbers = #tpu.dot_dimension_numbers<[1], [0], [0], [1], [0, 0, 1, 1], [], []>} : vector<24x5xbf16>, vector<5x64xbf16>, vector<24x64xf32> -> vector<24x64xf32>
    %c0_3 = arith.constant 0 : index
    %c0_4 = arith.constant 0 : index
    %3 = vector.load %arg3[%c0_3, %c0_4] : memref<1x64xf32, #tpu.memory_space<vmem>>, vector<1x64xf32>
    %4 = vector.broadcast %3 : vector<1x64xf32> to vector<24x64xf32>
    %5 = arith.addf %2, %4 : vector<24x64xf32>
    %cst_5 = arith.constant 0.000000e+00 : f32
    %6 = vector.broadcast %cst_5 : f32 to vector<24x64xf32>
    %7 = arith.maximumf %5, %6 : vector<24x64xf32>
    %8 = arith.truncf %7 : vector<24x64xf32> to vector<24x64xbf16>
    %c0_6 = arith.constant 0 : index
    %c0_7 = arith.constant 0 : index
    %9 = vector.load %arg4[%c0_6, %c0_7] : memref<64x320xbf16, #tpu.memory_space<vmem>>, vector<64x320xbf16>
    %cst_8 = arith.constant dense<0.000000e+00> : vector<24x320xf32>
    %10 = tpu.matmul %8, %9, %cst_8 {dimension_numbers = #tpu.dot_dimension_numbers<[1], [0], [0], [1], [0, 0, 1, 1], [], []>} : vector<24x64xbf16>, vector<64x320xbf16>, vector<24x320xf32> -> vector<24x320xf32>
    %c0_9 = arith.constant 0 : index
    %c0_10 = arith.constant 0 : index
    %11 = vector.load %arg5[%c0_9, %c0_10] : memref<1x320xf32, #tpu.memory_space<vmem>>, vector<1x320xf32>
    %12 = vector.broadcast %11 : vector<1x320xf32> to vector<24x320xf32>
    %13 = arith.addf %10, %12 : vector<24x320xf32>
    %c0_11 = arith.constant 0 : index
    %c0_12 = arith.constant 0 : index
    %14 = vector.load %arg6[%c0_11, %c0_12] : memref<24x320xf32, #tpu.memory_space<vmem>>, vector<24x320xf32>
    tpu.vector_store %arg6[%c0_11, %c0_12], %13 {strides = array<i32>} : memref<24x320xf32, #tpu.memory_space<vmem>>, vector<24x320xf32>,
    return
  }
  func.func @transform_0(%arg0: i32) -> (i32, i32) {
    %c0_i32 = arith.constant 0 : i32
    %c0_i32_0 = arith.constant 0 : i32
    return %arg0, %c0_i32 : i32, i32
  }
  func.func @transform_1(%arg0: i32) -> (i32, i32) {
    %c0_i32 = arith.constant 0 : i32
    %c0_i32_0 = arith.constant 0 : i32
    %c0_i32_1 = arith.constant 0 : i32
    return %c0_i32, %c0_i32_0 : i32, i32
  }
  func.func @transform_2(%arg0: i32) -> (i32, i32) {
    %c0_i32 = arith.constant 0 : i32
    %c0_i32_0 = arith.constant 0 : i32
    %c0_i32_1 = arith.constant 0 : i32
    return %c0_i32, %c0_i32_0 : i32, i32
  }
  func.func @transform_3(%arg0: i32) -> (i32, i32) {
    %c0_i32 = arith.constant 0 : i32
    %c0_i32_0 = arith.constant 0 : i32
    %c0_i32_1 = arith.constant 0 : i32
    return %c0_i32, %c0_i32_0 : i32, i32
  }
  func.func @transform_4(%arg0: i32) -> (i32, i32) {
    %c0_i32 = arith.constant 0 : i32
    %c0_i32_0 = arith.constant 0 : i32
    %c0_i32_1 = arith.constant 0 : i32
    return %c0_i32, %c0_i32_0 : i32, i32
  }
  func.func @transform_5(%arg0: i32) -> (i32, i32) {
    %c0_i32 = arith.constant 0 : i32
    %c0_i32_0 = arith.constant 0 : i32
    return %arg0, %c0_i32 : i32, i32
  }
}

</mosaic_0001>

<llo_original>
// kernel: tpu_custom_call.1
$region0: #{tpu_custom_call.1}
  #allocation0 [shape = 'u32[]', space=smem, size = 0x4, offset = 0x4, fixed_abs, tag = 'smem constant byte address 0x4 - core index']
  #allocation1 [shape = 'u32[144,128]{1,0:T(1,128)}', space=vmem, size = 0x12000, scoped, tag = 'internal scratch']
  %s0 = inlined_call_operand.vmem [shape: bf16[24,5], index: 0, kind: input, shape index: {}]
  %s1 = inlined_call_operand.vmem [shape: bf16[5,64], index: 1, kind: input, shape index: {}]
  %s2 = inlined_call_operand.vmem [shape: f32[1,64], index: 2, kind: input, shape index: {}]
  %s3 = inlined_call_operand.hbm [shape: bf16[64,320], index: 3, kind: input, shape index: {}]
  %s4 = inlined_call_operand.vmem [shape: f32[1,320], index: 4, kind: input, shape index: {}]
  %s5 = inlined_call_operand.hbm [shape: f32[24,320], index: 5, kind: output, shape index: {}]
  %s6 = sld [smem:[#allocation0]]
  $region34: #{tpu_custom_call.1} parent=0
    _
  %s8 = ssub.s32 1, %s6
  %s9 = scalar_select 0, %s8, %s6
  $region1: #{tpu_custom_call.1} parent=0
    #allocation2 [shape = 'u8[49152]{0}', space=vmem, size = 0xc000, scoped, tag = 'input window, operand 3, single buffered']
    #allocation3 [shape = 's32[1]{0}', space=sflag, size = 0x4, scoped, tag = 'scoped memory for tpu_custom_call.1']
    #allocation4 [shape = 's32[1]{0}', space=sflag, size = 0x4, scoped, tag = 'scoped memory for tpu_custom_call.1']
    #allocation5 [shape = 'u8[36864]{0}', space=vmem, size = 0x9000, scoped, tag = 'output window, operand 0, single buffered']
    %10 = vsyncpa [#allocation3], 0
    %11 = vsyncpa [#allocation4], 0
    // Predicated region
    $region2: #{tpu_custom_call.1} parent=1 // pred_check
      _
    $region3: #{tpu_custom_call.1} parent=1 // pred_check_branch
      %13 = sbr.rel (0) target = $region5
    $region4: #{tpu_custom_call.1} parent=1 // pred_region
      _
    $region5: #{tpu_custom_call.1} parent=1 // pred_fallthru
      _
    // Predicated region
    $region6: #{tpu_custom_call.1} parent=1 // pred_check
      _
    $region7: #{tpu_custom_call.1} parent=1 // pred_check_branch
      %15 = sbr.rel (0) target = $region9
    $region8: #{tpu_custom_call.1} parent=1 // pred_region
      _
    $region9: #{tpu_custom_call.1} parent=1 // pred_fallthru
      _
    // Predicated region
    $region10: #{tpu_custom_call.1} parent=1 // pred_check
      _
    $region11: #{tpu_custom_call.1} parent=1 // pred_check_branch
      %17 = sbr.rel (0) target = $region13
    $region12: #{tpu_custom_call.1} parent=1 // pred_region
      _
    $region13: #{tpu_custom_call.1} parent=1 // pred_fallthru
      _
    // Predicated region
    $region14: #{tpu_custom_call.1} parent=1 // pred_check
      _
    $region15: #{tpu_custom_call.1} parent=1 // pred_check_branch
      %19 = sbr.rel (0) target = $region17
    $region16: #{tpu_custom_call.1} parent=1 // pred_region
      %s21 = ssub.s32 1536, 1536
      %22 = vsyncadd [#allocation3], %s21
      %s23 = sshll.u32 [#allocation2], 4
      %s24 = int_to_ptr.vmem [resolvable:$true] %s23
      %29 = dma.hbm_to_vmem [thread:$0]  %s3, 1536, %s24, [#allocation3], 192, 192, 12
    $region17: #{tpu_custom_call.1} parent=1 // pred_fallthru
      _
    // Predicated region
    $region18: #{tpu_custom_call.1} parent=1 // pred_check
      _
    $region19: #{tpu_custom_call.1} parent=1 // pred_check_branch
      %31 = sbr.rel (0) target = $region21
    $region20: #{tpu_custom_call.1} parent=1 // pred_region
      _
    $region21: #{tpu_custom_call.1} parent=1 // pred_fallthru
      _
    // Predicated region
    $region22: #{tpu_custom_call.1} parent=1 // pred_check
      _
    $region23: #{tpu_custom_call.1} parent=1 // pred_check_branch
      %33 = sbr.rel (0) target = $region25
    $region24: #{tpu_custom_call.1} parent=1 // pred_region
      %34 = dma.done [#allocation3], 1536
    $region25: #{tpu_custom_call.1} parent=1 // pred_fallthru
      _
    %v36 = vld [vmem:[%s0] sm:$0xf]
    %v37 = vld [vmem:[%s0 + $0x4] sm:$0xf]
    %v38 = vld [vmem:[%s0 + $0x8] sm:$0xf]
    %v39 = vld [vmem:[%s1] sm:$0x7]
    %v40 = vld [vmem:[%s2] sm:$0x1]
    %v42 = vlaneseq
    %v43 = vshrl.u32 %v42, 7
    %v44 = vsub.s32 0, %v43
    %v45 = vrot.slane %v40, %v44
    %v50 = vunpack.c.l.b16 %v36
    %v51 = vunpack.c.l.b16 %v37
    %v52 = vunpack.c.l.b16 %v38
    %v53 = vpack.c.b16 %v51, %v50
    %v54 = vpack.c.b16 %v52, %v52
    %vm55 = vcmask 39936
    %v57 = vsel %vm55, %v53, 0
    %v60 = vsel %vm55, %v54, 0
    %vm62 = vcmask 1041408
    %vm63 = vcmask 1042432
    %v64 = vsel %vm62, 4294967295, 65535
    %v65 = vsel %vm63, %v64, 0
    %v67 = vand.u32 %v39, %v65
    %69 = vmatprep.subr.bf16.mxu0 0
    %70 = vmatpush1.bf16.msra.mxu0 0
    %71 = vmatprep.subr.bf16.mxu0 0
    %72 = vmatpush1.bf16.msra.mxu0 0
    %73 = vmatprep.subr.bf16.mxu0 0
    %74 = vmatpush1.bf16.msra.mxu0 0
    %75 = vmatprep.subr.bf16.mxu0 0
    %76 = vmatpush1.bf16.msra.mxu0 0
    %77 = vmatprep.subr.bf16.mxu0 0
    %78 = vmatpush1.bf16.msra.mxu0 0
    %79 = vmatprep.subr.bf16.mxu0 0
    %80 = vmatpush1.bf16.msra.mxu0 0
    %81 = vmatprep.subr.bf16.mxu0 0
    %82 = vmatpush1.bf16.msra.mxu0 0
    %83 = vmatprep.subr.bf16.mxu0 0
    %84 = vmatpush1.bf16.msra.mxu0 %v67
    %85 = vmatprep.subr.bf16.mxu0 0
    %86 = vmatpush2.bf16.msra.mxu0 0
    %87 = vmatprep.subr.bf16.mxu0 0
    %88 = vmatpush2.bf16.msra.mxu0 0
    %89 = vmatprep.subr.bf16.mxu0 0
    %90 = vmatpush2.bf16.msra.mxu0 0
    %91 = vmatprep.subr.bf16.mxu0 0
    %92 = vmatpush2.bf16.msra.mxu0 0
    %93 = vmatprep.subr.bf16.mxu0 0
    %94 = vmatpush2.bf16.msra.mxu0 0
    %95 = vmatprep.subr.bf16.mxu0 0
    %96 = vmatpush2.bf16.msra.mxu0 0
    %97 = vmatprep.subr.bf16.mxu0 0
    %98 = vmatpush2.bf16.msra.mxu0 0
    %99 = vmatprep.subr.bf16.mxu0 0
    %100 = vmatpush2.bf16.msra.mxu0 0
    %101 = vmatprep.mubr.bf16.mxu0 0
    %102 = vmatmul.mubr.bf16.gmra.mxu0 %v57
    %v103 = vpop.f32.mrf.mxu0
    %v104 = vadd.f32 %v45, %v103
    %v105 = vpop.f32.mrf.mxu0
    %v106 = vpop.f32.mrf.mxu0
    %v107 = vadd.f32 %v45, %v106
    %v108 = vpop.f32.mrf.mxu0
    %109 = vmatprep.mubr.bf16.mxu0 0
    %110 = vmatmul.mubr.bf16.gmra.mxu0 %v60
    %v111 = vpop.f32.mrf.mxu0
    %v112 = vadd.f32 %v45, %v111
    %v113 = vpop.f32.mrf.mxu0
    %v114 = vpop.f32.mrf.mxu0
    %v115 = vpop.f32.mrf.mxu0
    %116 = vdwg.mxu0
    %v117 = vmax.f32 %v104, 0.0
    %v118 = vmax.f32 %v107, 0.0
    %v119 = vmax.f32 %v112, 0.0
    %v120 = vpack.c.bf16 %v118, %v117
    %v121 = vpack.c.bf16 %v119, %v119
    %v122 = vld [vmem:[#allocation2] sm:$0xff]
    %v123 = vld [vmem:[#allocation2 + $0x8] sm:$0xf]
    %v124 = vld [vmem:[#allocation2 + $0xc] sm:$0xff]
    %v125 = vld [vmem:[#allocation2 + $0x14] sm:$0xf]
    %v126 = vld [vmem:[#allocation2 + $0x18] sm:$0xff]
    %v127 = vld [vmem:[#allocation2 + $0x20] sm:$0xf]
    %v128 = vld [vmem:[#allocation2 + $0x24] sm:$0xff]
    %v129 = vld [vmem:[#allocation2 + $0x2c] sm:$0xf]
    %v130 = vld [vmem:[#allocation2 + $0x30] sm:$0xff]
    %v131 = vld [vmem:[#allocation2 + $0x38] sm:$0xf]
    %v132 = vld [vmem:[#allocation2 + $0x3c] sm:$0xff]
    %v133 = vld [vmem:[#allocation2 + $0x44] sm:$0xf]
    %v134 = vld [vmem:[#allocation2 + $0x48] sm:$0xff]
    %v135 = vld [vmem:[#allocation2 + $0x50] sm:$0xf]
    %v136 = vld [vmem:[#allocation2 + $0x54] sm:$0xff]
    %v137 = vld [vmem:[#allocation2 + $0x5c] sm:$0xf]
    %v138 = vld [vmem:[%s4] sm:$0x7]
    %v140 = vlaneseq
    %v141 = vshrl.u32 %v140, 7
    %v142 = vsub.s32 0, %v141
    %v143 = vrot.slane %v138, %v142
    %v144 = vlaneseq
    %v145 = vshrl.u32 %v144, 7
    %v146 = vsub.s32 1, %v145
    %v147 = vrot.slane %v138, %v146
    %v148 = vlaneseq
    %v149 = vshrl.u32 %v148, 7
    %v150 = vsub.s32 2, %v149
    %v151 = vrot.slane %v138, %v150
    %v171 = vunpack.c.l.b16 %v122
    %v172 = vunpack.c.h.b16 %v122
    %v173 = vunpack.c.l.b16 %v123
    %v174 = vunpack.c.l.b16 %v124
    %v175 = vunpack.c.h.b16 %v124
    %v176 = vunpack.c.l.b16 %v125
    %v177 = vunpack.c.l.b16 %v126
    %v178 = vunpack.c.h.b16 %v126
    %v179 = vunpack.c.l.b16 %v127
    %v180 = vunpack.c.l.b16 %v128
    %v181 = vunpack.c.h.b16 %v128
    %v182 = vunpack.c.l.b16 %v129
    %v183 = vunpack.c.l.b16 %v130
    %v184 = vunpack.c.h.b16 %v130
    %v185 = vunpack.c.l.b16 %v131
    %v186 = vunpack.c.l.b16 %v132
    %v187 = vunpack.c.h.b16 %v132
    %v188 = vunpack.c.l.b16 %v133
    %v189 = vunpack.c.l.b16 %v134
    %v190 = vunpack.c.h.b16 %v134
    %v191 = vunpack.c.l.b16 %v135
    %v192 = vunpack.c.l.b16 %v136
    %v193 = vunpack.c.h.b16 %v136
    %v194 = vunpack.c.l.b16 %v137
    %v195 = vpack.c.b16 %v174, %v171
    %v196 = vpack.c.b16 %v175, %v172
    %v197 = vpack.c.b16 %v176, %v173
    %v198 = vpack.c.b16 %v180, %v177
    %v199 = vpack.c.b16 %v181, %v178
    %v200 = vpack.c.b16 %v182, %v179
    %v201 = vpack.c.b16 %v186, %v183
    %v202 = vpack.c.b16 %v187, %v184
    %v203 = vpack.c.b16 %v188, %v185
    %v204 = vpack.c.b16 %v192, %v189
    %v205 = vpack.c.b16 %v193, %v190
    %v206 = vpack.c.b16 %v194, %v191
    %vm219 = vcmask 523264
    %v221 = vsel %vm219, %v120, 0
    %v224 = vsel %vm219, %v121, 0
    %226 = vmatprep.subr.bf16.mxu0 0
    %227 = vmatpush1.bf16.msra.mxu0 0
    %228 = vmatprep.subr.bf16.mxu0 0
    %229 = vmatpush1.bf16.msra.mxu0 0
    %230 = vmatprep.subr.bf16.mxu0 0
    %231 = vmatpush1.bf16.msra.mxu0 0
    %232 = vmatprep.subr.bf16.mxu0 0
    %233 = vmatpush1.bf16.msra.mxu0 0
    %234 = vmatprep.subr.bf16.mxu0 %v205
    %235 = vmatpush1.bf16.msra.mxu0 %v204
    %236 = vmatprep.subr.bf16.mxu0 %v202
    %237 = vmatpush1.bf16.msra.mxu0 %v201
    %238 = vmatprep.subr.bf16.mxu0 %v199
    %239 = vmatpush1.bf16.msra.mxu0 %v198
    %240 = vmatprep.subr.bf16.mxu0 %v196
    %241 = vmatpush1.bf16.msra.mxu0 %v195
    %242 = vmatprep.subr.bf16.mxu0 0
    %243 = vmatpush2.bf16.msra.mxu0 0
    %244 = vmatprep.subr.bf16.mxu0 0
    %245 = vmatpush2.bf16.msra.mxu0 0
    %246 = vmatprep.subr.bf16.mxu0 0
    %247 = vmatpush2.bf16.msra.mxu0 0
    %248 = vmatprep.subr.bf16.mxu0 0
    %249 = vmatpush2.bf16.msra.mxu0 0
    %250 = vmatprep.subr.bf16.mxu0 0
    %251 = vmatpush2.bf16.msra.mxu0 0
    %252 = vmatprep.subr.bf16.mxu0 0
    %253 = vmatpush2.bf16.msra.mxu0 0
    %254 = vmatprep.subr.bf16.mxu0 0
    %255 = vmatpush2.bf16.msra.mxu0 0
    %256 = vmatprep.subr.bf16.mxu0 0
    %257 = vmatpush2.bf16.msra.mxu0 0
    %258 = vmatprep.mubr.bf16.mxu0 0
    %259 = vmatmul.mubr.bf16.gmra.mxu0 %v221
    %v260 = vpop.f32.mrf.mxu0
    %v261 = vadd.f32 %v143, %v260
    %v262 = vpop.f32.mrf.mxu0
    %v263 = vadd.f32 %v147, %v262
    %v264 = vpop.f32.mrf.mxu0
    %v265 = vadd.f32 %v143, %v264
    %v266 = vpop.f32.mrf.mxu0
    %v267 = vadd.f32 %v147, %v266
    %268 = vmatprep.mubr.bf16.mxu0 0
    %269 = vmatmul.mubr.bf16.gmra.mxu0 %v224
    %v270 = vpop.f32.mrf.mxu0
    %v271 = vadd.f32 %v143, %v270
    %v272 = vpop.f32.mrf.mxu0
    %v273 = vadd.f32 %v147, %v272
    %v274 = vpop.f32.mrf.mxu0
    %v275 = vpop.f32.mrf.mxu0
    %276 = vdwg.mxu0
    %277 = vmatprep.subr.bf16.mxu0 0
    %278 = vmatpush1.bf16.msra.mxu0 0
    %279 = vmatprep.subr.bf16.mxu0 0
    %280 = vmatpush1.bf16.msra.mxu0 0
    %281 = vmatprep.subr.bf16.mxu0 0
    %282 = vmatpush1.bf16.msra.mxu0 0
    %283 = vmatprep.subr.bf16.mxu0 0
    %284 = vmatpush1.bf16.msra.mxu0 0
    %285 = vmatprep.subr.bf16.mxu0 0
    %286 = vmatpush1.bf16.msra.mxu0 %v206
    %287 = vmatprep.subr.bf16.mxu0 0
    %288 = vmatpush1.bf16.msra.mxu0 %v203
    %289 = vmatprep.subr.bf16.mxu0 0
    %290 = vmatpush1.bf16.msra.mxu0 %v200
    %291 = vmatprep.subr.bf16.mxu0 0
    %292 = vmatpush1.bf16.msra.mxu0 %v197
    %293 = vmatprep.subr.bf16.mxu0 0
    %294 = vmatpush2.bf16.msra.mxu0 0
    %295 = vmatprep.subr.bf16.mxu0 0
    %296 = vmatpush2.bf16.msra.mxu0 0
    %297 = vmatprep.subr.bf16.mxu0 0
    %298 = vmatpush2.bf16.msra.mxu0 0
    %299 = vmatprep.subr.bf16.mxu0 0
    %300 = vmatpush2.bf16.msra.mxu0 0
    %301 = vmatprep.subr.bf16.mxu0 0
    %302 = vmatpush2.bf16.msra.mxu0 0
    %303 = vmatprep.subr.bf16.mxu0 0
    %304 = vmatpush2.bf16.msra.mxu0 0
    %305 = vmatprep.subr.bf16.mxu0 0
    %306 = vmatpush2.bf16.msra.mxu0 0
    %307 = vmatprep.subr.bf16.mxu0 0
    %308 = vmatpush2.bf16.msra.mxu0 0
    %309 = vmatprep.mubr.bf16.mxu0 0
    %310 = vmatmul.mubr.bf16.gmra.mxu0 %v221
    %v311 = vpop.f32.mrf.mxu0
    %v312 = vadd.f32 %v151, %v311
    %v313 = vpop.f32.mrf.mxu0
    %v314 = vpop.f32.mrf.mxu0
    %v315 = vadd.f32 %v151, %v314
    %v316 = vpop.f32.mrf.mxu0
    %317 = vmatprep.mubr.bf16.mxu0 0
    %318 = vmatmul.mubr.bf16.gmra.mxu0 %v224
    %v319 = vpop.f32.mrf.mxu0
    %v320 = vadd.f32 %v151, %v319
    %v321 = vpop.f32.mrf.mxu0
    %v322 = vpop.f32.mrf.mxu0
    %v323 = vpop.f32.mrf.mxu0
    %324 = vdwg.mxu0
    %325 = vst [vmem:[#allocation5] sm:$0xff] %v261
    %326 = vst [vmem:[#allocation5 + $0x8] sm:$0xff] %v263
    %327 = vst.msk [vmem:[#allocation5 + $0x10] sm:$0xff] %vm219, %v312
    %328 = vst [vmem:[#allocation5 + $0x18] sm:$0xff] %v265
    %329 = vst [vmem:[#allocation5 + $0x20] sm:$0xff] %v267
    %330 = vst.msk [vmem:[#allocation5 + $0x28] sm:$0xff] %vm219, %v315
    %331 = vst [vmem:[#allocation5 + $0x30] sm:$0xff] %v271
    %332 = vst [vmem:[#allocation5 + $0x38] sm:$0xff] %v273
    %333 = vst.msk [vmem:[#allocation5 + $0x40] sm:$0xff] %vm219, %v320
    // Predicated region
    $region26: #{tpu_custom_call.1} parent=1 // pred_check
      _
    $region27: #{tpu_custom_call.1} parent=1 // pred_check_branch
      %335 = sbr.rel (0) target = $region29
    $region28: #{tpu_custom_call.1} parent=1 // pred_region
      %s337 = ssub.s32 1152, 1152
      %338 = vsyncadd [#allocation4], %s337
      %s339 = sshll.u32 [#allocation5], 4
      %s340 = int_to_ptr.vmem [resolvable:$true] %s339
      %345 = dma.vmem_to_hbm [thread:$0]  %s340, 1152, %s5, [#allocation4], 384, 384, 24
    $region29: #{tpu_custom_call.1} parent=1 // pred_fallthru
      _
    // Predicated region
    $region30: #{tpu_custom_call.1} parent=1 // pred_check
      _
    $region31: #{tpu_custom_call.1} parent=1 // pred_check_branch
      %347 = sbr.rel (0) target = $region33
    $region32: #{tpu_custom_call.1} parent=1 // pred_region
      %348 = dma.done [#allocation4], 1152
    $region33: #{tpu_custom_call.1} parent=1 // pred_fallthru
      _
    %349 = vsyncpa [#allocation3], 1
    %350 = vsyncpa [#allocation4], 1

</llo_original>
